<compile_context>
chip_gen: v7x
topology: tpu7x:2x2x1
jax: 0.10.0
libtpu: 0.0.40
codegen_flags: <defaults>
</compile_context>

<pallas_src>
import jax
import jax.numpy as jnp
from jax.experimental import pallas as pl
from jax.experimental.pallas import tpu as pltpu

IN_F = 4
HIDDEN = 10
OUT_F = 2

# Conservative VMEM bytes per batch element of a tile (feature-major layout):
#   2 x double-buffered x tile (4->8 sublanes)      =  64 B
#   2 x double-buffered out tile (2->8 sublanes)    =  64 B
#   h intermediate (10->16 sublanes) + logits/temps ~= 160 B
_BYTES_PER_BATCH_ELEM = 320


def _policy_kernel(xt_ref, w1_ref, b1_ref, w2_ref, b2_ref, o_ref):
    # xt_ref: (4, TB)  feature-major input tile (batch on the 128-lane axis)
    # w1_ref: (10, 4), b1_ref: (10, 1), w2_ref: (2, 10), b2_ref: (2, 1)
    # o_ref : (2, TB)  softmax probabilities, feature-major (lane-dense store)
    xt = xt_ref[...]

    # Hidden layer: (10,4) @ (4,TB) + (10,1) -> ReLU
    h = jnp.dot(w1_ref[...], xt, preferred_element_type=jnp.float32) + b1_ref[...]
    h = jnp.maximum(h, 0.0)

    # Output layer: (2,10) @ (10,TB) + (2,1)
    logits = jnp.dot(w2_ref[...], h, preferred_element_type=jnp.float32) + b2_ref[...]

    # 2-class softmax as a numerically-stable sigmoid of the logit difference:
    #   d = l0 - l1;  p(larger) = 1/(1+e),  p(smaller) = e/(1+e),  e = exp(-|d|)
    # One exp on (1, TB) (EUP), no cross-lane reductions, pure row-wise VPU ops.
    d = logits[0:1, :] - logits[1:2, :]          # (1, TB)
    e = jnp.exp(-jnp.abs(d))                     # (1, TB), in (0, 1]
    denom = 1.0 + e

    # EUP approximate reciprocal (free bundle slot) + two Newton steps -> f32 exact.
    inv = pl.reciprocal(denom, approx=True)
    inv = inv * (2.0 - denom * inv)
    inv = inv * (2.0 - denom * inv)

    p_hi = inv                                   # prob of the larger logit
    p_lo = e * inv                               # prob of the smaller logit
    pos = d >= 0.0
    p0 = jnp.where(pos, p_hi, p_lo)
    p1 = jnp.where(pos, p_lo, p_hi)

    # Single dense, lane-dense full-block store.
    o_ref[...] = jnp.concatenate([p0, p1], axis=0)


def _tile_params(batch, max_tb):
    """Pick a lane-aligned batch tile, its padded batch, and an explicit VMEM limit."""
    assert max_tb >= 128 and max_tb % 128 == 0, "max_tb must be a positive multiple of 128"
    bp128 = pl.cdiv(batch, 128) * 128

    # Generation-aware VMEM budget (v7x: 64 MiB per TensorCore; v5e/v6e: 128 MiB).
    try:
        vmem_cap = int(pltpu.get_tpu_info().vmem_capacity_bytes)
    except Exception:
        vmem_cap = 64 << 20                       # conservative fallback (v7x per-TC)
    vmem_budget = max(16 << 20, vmem_cap // 2)    # leave headroom for compiler scratch

    tb_vmem_cap = max(128, ((vmem_budget - (2 << 20)) // _BYTES_PER_BATCH_ELEM) // 128 * 128)
    tb = min(max_tb, bp128, tb_vmem_cap)

    # Guarantee >= 2 grid steps when the batch allows it, so the "parallel" batch axis
    # can shard across the two TensorCores on v7x (no-op on single-TC v5e/v6e).
    if bp128 >= 256:
        tb = min(tb, max(128, (bp128 // 2) // 128 * 128))

    bp = pl.cdiv(bp128, tb) * tb
    vmem_limit = int(min(vmem_budget,
                         max(32 << 20, _BYTES_PER_BATCH_ELEM * tb + (4 << 20))))
    return tb, bp, vmem_limit


def _pallas_forward_t(xt_bp, w1, b1, w2, b2, tb, vmem_limit):
    """xt_bp: (4, BP) with BP % tb == 0.  Returns (2, BP) probabilities."""
    bp = xt_bp.shape[1]
    return pl.pallas_call(
        _policy_kernel,
        out_shape=jax.ShapeDtypeStruct((OUT_F, bp), jnp.float32),
        grid_spec=pltpu.PrefetchScalarGridSpec(
            num_scalar_prefetch=0,
            grid=(bp // tb,),
            in_specs=[
                pl.BlockSpec((IN_F, tb), lambda i: (0, i)),        # x tile, pipelined
                pl.BlockSpec((HIDDEN, IN_F), lambda i: (0, 0)),    # weights: VMEM-resident
                pl.BlockSpec((HIDDEN, 1), lambda i: (0, 0)),
                pl.BlockSpec((OUT_F, HIDDEN), lambda i: (0, 0)),
                pl.BlockSpec((OUT_F, 1), lambda i: (0, 0)),
            ],
            out_specs=pl.BlockSpec((OUT_F, tb), lambda i: (0, i)),
        ),
        compiler_params=pltpu.CompilerParams(
            dimension_semantics=("parallel",),     # shard batch across TCs (v7x)
            vmem_limit_bytes=vmem_limit,           # explicit; don't rely on scoped default
        ),
    )(xt_bp, w1, b1, w2, b2)


def policy_network_forward_feature_major(xt, w1, b1, w2, b2, *, max_tb=16384):
    """Zero-relayout fast path.  xt: (4, B) feature-major -> (2, B) probabilities."""
    B = xt.shape[1]
    if B == 0:
        return jnp.zeros((OUT_F, 0), jnp.float32)
    tb, bp, vmem_limit = _tile_params(B, max_tb)
    xt_bp = jnp.pad(xt.astype(jnp.float32), ((0, 0), (0, bp - B)))   # no-op when aligned
    out_t = _pallas_forward_t(xt_bp, w1, b1, w2, b2, tb, vmem_limit)
    return out_t[:, :B]


def policy_network_forward(x, w1, b1, w2, b2, *, max_tb=16384):
    """Torch-layout wrapper.  x: (B, 4) -> (B, 2) probabilities.

    Does one fused pad+transpose over x; callers that can keep states feature-major
    should use policy_network_forward_feature_major and skip that HBM pass entirely.
    """
    B = x.shape[0]
    if B == 0:
        return jnp.zeros((0, OUT_F), jnp.float32)
    tb, bp, vmem_limit = _tile_params(B, max_tb)
    xt_bp = jnp.pad(x.astype(jnp.float32), ((0, bp - B), (0, 0))).T  # (4, BP)
    out_t = _pallas_forward_t(xt_bp, w1, b1, w2, b2, tb, vmem_limit)
    return out_t[:, :B].T


def init_params(key):
    """torch.nn.Linear default init: uniform(-1/sqrt(fan_in), +1/sqrt(fan_in)).

    Stored in torch layout (out_features, in_features); biases as (out_features, 1).
    """
    k1, k2, k3, k4 = jax.random.split(key, 4)
    bound1 = 1.0 / jnp.sqrt(4.0)
    bound2 = 1.0 / jnp.sqrt(10.0)
    w1 = jax.random.uniform(k1, (HIDDEN, IN_F), jnp.float32, -bound1, bound1)
    b1 = jax.random.uniform(k2, (HIDDEN, 1), jnp.float32, -bound1, bound1)
    w2 = jax.random.uniform(k3, (OUT_F, HIDDEN), jnp.float32, -bound2, bound2)
    b2 = jax.random.uniform(k4, (OUT_F, 1), jnp.float32, -bound2, bound2)
    return w1, b1, w2, b2


def reference_forward(x, w1, b1, w2, b2):
    h = jnp.maximum(x @ w1.T + b1[:, 0], 0.0)
    logits = h @ w2.T + b2[:, 0]
    return jax.nn.softmax(logits, axis=-1)


if __name__ == "__main__":
    key = jax.random.PRNGKey(0)
    kx, kp, kx2 = jax.random.split(key, 3)
    w1, b1, w2, b2 = init_params(kp)

    # Small batch of CartPole-like 4-dim states (torch-layout wrapper path).
    B = 8
    x = jax.random.normal(kx, (B, IN_F), jnp.float32)
    out = jax.block_until_ready(policy_network_forward(x, w1, b1, w2, b2))
    ref = reference_forward(x, w1, b1, w2, b2)
    assert out.shape == (B, OUT_F)
    assert jnp.allclose(out, ref, atol=1e-5, rtol=1e-5)
    assert jnp.allclose(jnp.sum(out, axis=-1), jnp.ones((B,)), atol=1e-5)

    # Ragged multi-tile batch through the zero-relayout feature-major path.
    B2 = 300
    x2 = jax.random.normal(kx2, (B2, IN_F), jnp.float32)
    out2 = jax.block_until_ready(
        policy_network_forward_feature_major(x2.T, w1, b1, w2, b2))
    ref2 = reference_forward(x2, w1, b1, w2, b2)
    assert out2.shape == (OUT_F, B2)
    assert jnp.allclose(out2.T, ref2, atol=1e-5, rtol=1e-5)

    # B = 0 degenerate case (review correctness concern).
    out0 = policy_network_forward(jnp.zeros((0, IN_F), jnp.float32), w1, b1, w2, b2)
    assert out0.shape == (0, OUT_F)

    print("KERNEL_OK")
</pallas_src>

<mosaic_0001>
module attributes {stable_mosaic.version = 11 : i64} {
  func.func @_policy_kernel(%arg0: i32, %arg1: memref<4x128xf32, #tpu.memory_space<vmem>>, %arg2: memref<10x4xf32, #tpu.memory_space<vmem>>, %arg3: memref<10x1xf32, #tpu.memory_space<vmem>>, %arg4: memref<2x10xf32, #tpu.memory_space<vmem>>, %arg5: memref<2x1xf32, #tpu.memory_space<vmem>>, %arg6: memref<2x128xf32, #tpu.memory_space<vmem>>) attributes {dimension_semantics = [#tpu.dimension_semantics<parallel>], iteration_bounds = array<i64: 1>, scalar_prefetch = 0 : i64, scratch_operands = 0 : i64, tpu.core_type = #tpu.core_type<tc>, window_params = [{transform_indices = @transform_0, window_bounds = array<i64: 4, 128>}, {pipeline_mode = #tpu.pipeline_mode<synchronous>, transform_indices = @transform_1, window_bounds = array<i64: 10, 4>}, {pipeline_mode = #tpu.pipeline_mode<synchronous>, transform_indices = @transform_2, window_bounds = array<i64: 10, 1>}, {pipeline_mode = #tpu.pipeline_mode<synchronous>, transform_indices = @transform_3, window_bounds = array<i64: 2, 10>}, {pipeline_mode = #tpu.pipeline_mode<synchronous>, transform_indices = @transform_4, window_bounds = array<i64: 2, 1>}, {transform_indices = @transform_5, window_bounds = array<i64: 2, 128>}]} {
    %c0 = arith.constant 0 : index
    %c0_0 = arith.constant 0 : index
    %0 = vector.load %arg1[%c0, %c0_0] : memref<4x128xf32, #tpu.memory_space<vmem>>, vector<4x128xf32>
    %c0_1 = arith.constant 0 : index
    %c0_2 = arith.constant 0 : index
    %1 = vector.load %arg2[%c0_1, %c0_2] : memref<10x4xf32, #tpu.memory_space<vmem>>, vector<10x4xf32>
    %cst = arith.constant dense<0.000000e+00> : vector<10x128xf32>
    %2 = tpu.matmul %1, %0, %cst {dimension_numbers = #tpu.dot_dimension_numbers<[1], [0], [0], [1], [0, 0, 1, 1], [], []>} : vector<10x4xf32>, vector<4x128xf32>, vector<10x128xf32> -> vector<10x128xf32>
    %c0_3 = arith.constant 0 : index
    %c0_4 = arith.constant 0 : index
    %3 = vector.load %arg3[%c0_3, %c0_4] : memref<10x1xf32, #tpu.memory_space<vmem>>, vector<10x1xf32>
    %4 = vector.broadcast %3 : vector<10x1xf32> to vector<10x128xf32>
    %5 = arith.addf %2, %4 : vector<10x128xf32>
    %cst_5 = arith.constant 0.000000e+00 : f32
    %6 = vector.broadcast %cst_5 : f32 to vector<10x128xf32>
    %7 = arith.maximumf %5, %6 : vector<10x128xf32>
    %c0_6 = arith.constant 0 : index
    %c0_7 = arith.constant 0 : index
    %8 = vector.load %arg4[%c0_6, %c0_7] : memref<2x10xf32, #tpu.memory_space<vmem>>, vector<2x10xf32>
    %cst_8 = arith.constant dense<0.000000e+00> : vector<2x128xf32>
    %9 = tpu.matmul %8, %7, %cst_8 {dimension_numbers = #tpu.dot_dimension_numbers<[1], [0], [0], [1], [0, 0, 1, 1], [], []>} : vector<2x10xf32>, vector<10x128xf32>, vector<2x128xf32> -> vector<2x128xf32>
    %c0_9 = arith.constant 0 : index
    %c0_10 = arith.constant 0 : index
    %10 = vector.load %arg5[%c0_9, %c0_10] : memref<2x1xf32, #tpu.memory_space<vmem>>, vector<2x1xf32>
    %11 = vector.broadcast %10 : vector<2x1xf32> to vector<2x128xf32>
    %12 = arith.addf %9, %11 : vector<2x128xf32>
    %13 = vector.extract_strided_slice %12 {offsets = [0, 0], sizes = [1, 128], strides = [1, 1]} : vector<2x128xf32> to vector<1x128xf32>
    %14 = vector.extract_strided_slice %12 {offsets = [1, 0], sizes = [1, 128], strides = [1, 1]} : vector<2x128xf32> to vector<1x128xf32>
    %15 = arith.subf %13, %14 : vector<1x128xf32>
    %16 = math.absf %15 : vector<1x128xf32>
    %cst_11 = arith.constant 0.000000e+00 : f32
    %17 = vector.broadcast %cst_11 : f32 to vector<1x128xf32>
    %18 = arith.subf %17, %16 : vector<1x128xf32>
    %19 = math.exp %18 : vector<1x128xf32>
    %cst_12 = arith.constant 1.000000e+00 : f32
    %20 = vector.broadcast %cst_12 : f32 to vector<1x128xf32>
    %21 = arith.addf %20, %19 : vector<1x128xf32>
    %22 = tpu.reciprocal %21 {approx = true} : vector<1x128xf32> -> vector<1x128xf32>
    %23 = arith.mulf %21, %22 : vector<1x128xf32>
    %cst_13 = arith.constant 2.000000e+00 : f32
    %24 = vector.broadcast %cst_13 : f32 to vector<1x128xf32>
    %25 = arith.subf %24, %23 : vector<1x128xf32>
    %26 = arith.mulf %22, %25 : vector<1x128xf32>
    %27 = arith.mulf %21, %26 : vector<1x128xf32>
    %cst_14 = arith.constant 2.000000e+00 : f32
    %28 = vector.broadcast %cst_14 : f32 to vector<1x128xf32>
    %29 = arith.subf %28, %27 : vector<1x128xf32>
    %30 = arith.mulf %26, %29 : vector<1x128xf32>
    %31 = arith.mulf %19, %30 : vector<1x128xf32>
    %cst_15 = arith.constant 0.000000e+00 : f32
    %32 = vector.broadcast %cst_15 : f32 to vector<1x128xf32>
    %33 = arith.cmpf oge, %15, %32 : vector<1x128xf32>
    %34 = arith.select %33, %30, %31 : vector<1x128xi1>, vector<1x128xf32>
    %35 = arith.select %33, %31, %30 : vector<1x128xi1>, vector<1x128xf32>
    %36 = tpu.concatenate %34, %35 in 0 : vector<1x128xf32>, vector<1x128xf32> -> vector<2x128xf32>
    %c0_16 = arith.constant 0 : index
    %c0_17 = arith.constant 0 : index
    %37 = vector.load %arg6[%c0_16, %c0_17] : memref<2x128xf32, #tpu.memory_space<vmem>>, vector<2x128xf32>
    tpu.vector_store %arg6[%c0_16, %c0_17], %36 {strides = array<i32>} : memref<2x128xf32, #tpu.memory_space<vmem>>, vector<2x128xf32>,
    return
  }
  func.func @transform_0(%arg0: i32) -> (i32, i32) {
    %c0_i32 = arith.constant 0 : i32
    %c0_i32_0 = arith.constant 0 : i32
    return %c0_i32, %arg0 : i32, i32
  }
  func.func @transform_1(%arg0: i32) -> (i32, i32) {
    %c0_i32 = arith.constant 0 : i32
    %c0_i32_0 = arith.constant 0 : i32
    %c0_i32_1 = arith.constant 0 : i32
    return %c0_i32, %c0_i32_0 : i32, i32
  }
  func.func @transform_2(%arg0: i32) -> (i32, i32) {
    %c0_i32 = arith.constant 0 : i32
    %c0_i32_0 = arith.constant 0 : i32
    %c0_i32_1 = arith.constant 0 : i32
    return %c0_i32, %c0_i32_0 : i32, i32
  }
  func.func @transform_3(%arg0: i32) -> (i32, i32) {
    %c0_i32 = arith.constant 0 : i32
    %c0_i32_0 = arith.constant 0 : i32
    %c0_i32_1 = arith.constant 0 : i32
    return %c0_i32, %c0_i32_0 : i32, i32
  }
  func.func @transform_4(%arg0: i32) -> (i32, i32) {
    %c0_i32 = arith.constant 0 : i32
    %c0_i32_0 = arith.constant 0 : i32
    %c0_i32_1 = arith.constant 0 : i32
    return %c0_i32, %c0_i32_0 : i32, i32
  }
  func.func @transform_5(%arg0: i32) -> (i32, i32) {
    %c0_i32 = arith.constant 0 : i32
    %c0_i32_0 = arith.constant 0 : i32
    return %c0_i32, %arg0 : i32, i32
  }
}

</mosaic_0001>

<llo_original>
// kernel: tpu_custom_call.1
$region0: #{tpu_custom_call.1}
  #allocation0 [shape = 'u32[]', space=smem, size = 0x4, offset = 0x4, fixed_abs, tag = 'smem constant byte address 0x4 - core index']
  #allocation1 [shape = 'u32[144,128]{1,0:T(1,128)}', space=vmem, size = 0x12000, scoped, tag = 'internal scratch']
  %s0 = inlined_call_operand.vmem [shape: f32[4,128], index: 0, kind: input, shape index: {}]
  %s1 = inlined_call_operand.vmem [shape: f32[10,4], index: 1, kind: input, shape index: {}]
  %s2 = inlined_call_operand.vmem [shape: f32[10,1], index: 2, kind: input, shape index: {}]
  %s3 = inlined_call_operand.vmem [shape: f32[2,10], index: 3, kind: input, shape index: {}]
  %s4 = inlined_call_operand.vmem [shape: f32[2,1], index: 4, kind: input, shape index: {}]
  %s5 = inlined_call_operand.hbm [shape: f32[2,128], index: 5, kind: output, shape index: {}]
  %s6 = sld [smem:[#allocation0]]
  $region30: #{tpu_custom_call.1} parent=0
    _
  %s8 = ssub.s32 1, %s6
  %s9 = scalar_select 0, %s8, %s6
  $region1: #{tpu_custom_call.1} parent=0
    #allocation2 [shape = 'u8[1024]{0}', space=vmem, size = 0x400, scoped, tag = 'output window, operand 0, single buffered']
    #allocation3 [shape = 's32[1]{0}', space=sflag, size = 0x4, scoped, tag = 'scoped memory for tpu_custom_call.1']
    %10 = vsyncpa [#allocation3], 0
    // Predicated region
    $region2: #{tpu_custom_call.1} parent=1 // pred_check
      _
    $region3: #{tpu_custom_call.1} parent=1 // pred_check_branch
      %12 = sbr.rel (0) target = $region5
    $region4: #{tpu_custom_call.1} parent=1 // pred_region
      _
    $region5: #{tpu_custom_call.1} parent=1 // pred_fallthru
      _
    // Predicated region
    $region6: #{tpu_custom_call.1} parent=1 // pred_check
      _
    $region7: #{tpu_custom_call.1} parent=1 // pred_check_branch
      %14 = sbr.rel (0) target = $region9
    $region8: #{tpu_custom_call.1} parent=1 // pred_region
      _
    $region9: #{tpu_custom_call.1} parent=1 // pred_fallthru
      _
    // Predicated region
    $region10: #{tpu_custom_call.1} parent=1 // pred_check
      _
    $region11: #{tpu_custom_call.1} parent=1 // pred_check_branch
      %16 = sbr.rel (0) target = $region13
    $region12: #{tpu_custom_call.1} parent=1 // pred_region
      _
    $region13: #{tpu_custom_call.1} parent=1 // pred_fallthru
      _
    // Predicated region
    $region14: #{tpu_custom_call.1} parent=1 // pred_check
      _
    $region15: #{tpu_custom_call.1} parent=1 // pred_check_branch
      %18 = sbr.rel (0) target = $region17
    $region16: #{tpu_custom_call.1} parent=1 // pred_region
      _
    $region17: #{tpu_custom_call.1} parent=1 // pred_fallthru
      _
    // Predicated region
    $region18: #{tpu_custom_call.1} parent=1 // pred_check
      _
    $region19: #{tpu_custom_call.1} parent=1 // pred_check_branch
      %20 = sbr.rel (0) target = $region21
    $region20: #{tpu_custom_call.1} parent=1 // pred_region
      _
    $region21: #{tpu_custom_call.1} parent=1 // pred_fallthru
      _
    %v21 = vld [vmem:[%s0] sm:$0xf]
    %v22 = vld [vmem:[%s1] sm:$0xff]
    %v23 = vld [vmem:[%s1 + $0x8] sm:$0x3]
    %v24 = vld [vmem:[%s2] sm:$0xff]
    %v25 = vld [vmem:[%s2 + $0x8] sm:$0x3]
    %27 = vset.pattern.permute.xlu0 0
    %28 = vperm.xlu0 %27, %v24
    %v29 = vpop.permute.xlu0 %28
    %32 = vset.pattern.permute.xlu0 0
    %33 = vperm.xlu0 %32, %v25
    %v34 = vpop.permute.xlu0 %33
    %vm36 = vcmask 31744
    %v38 = vsel %vm36, %v22, 0
    %v41 = vsel %vm36, %v23, 0
    %vm43 = vcmask 1043456
    %v45 = vsel %vm43, %v21, 0
    %47 = vmatprep.subr.mxu0 0.0
    %48 = vmatpush1.msra.mxu0 %v45
    %49 = vmatprep.subr.mxu0 0.0
    %50 = vmatpush1.msra.mxu0 0.0
    %51 = vmatprep.subr.mxu0 0.0
    %52 = vmatpush1.msra.mxu0 0.0
    %53 = vmatprep.subr.mxu0 0.0
    %54 = vmatpush1.msra.mxu0 0.0
    %55 = vmatprep.subr.mxu0 0.0
    %56 = vmatpush1.msra.mxu0 0.0
    %57 = vmatprep.subr.mxu0 0.0
    %58 = vmatpush1.msra.mxu0 0.0
    %59 = vmatprep.subr.mxu0 0.0
    %60 = vmatpush1.msra.mxu0 0.0
    %61 = vmatprep.subr.mxu0 0.0
    %62 = vmatpush1.msra.mxu0 0.0
    %63 = vmatprep.subr.mxu0 0.0
    %64 = vmatpush1.msra.mxu0 0.0
    %65 = vmatprep.subr.mxu0 0.0
    %66 = vmatpush1.msra.mxu0 0.0
    %67 = vmatprep.subr.mxu0 0.0
    %68 = vmatpush1.msra.mxu0 0.0
    %69 = vmatprep.subr.mxu0 0.0
    %70 = vmatpush1.msra.mxu0 0.0
    %71 = vmatprep.subr.mxu0 0.0
    %72 = vmatpush1.msra.mxu0 0.0
    %73 = vmatprep.subr.mxu0 0.0
    %74 = vmatpush1.msra.mxu0 0.0
    %75 = vmatprep.subr.mxu0 0.0
    %76 = vmatpush1.msra.mxu0 0.0
    %77 = vmatprep.subr.mxu0 0.0
    %78 = vmatpush1.msra.mxu0 0.0
    %79 = vmatprep.subr.mxu0 0.0
    %80 = vmatpush1.msra.mxu0 0.0
    %81 = vmatprep.subr.mxu0 0.0
    %82 = vmatpush1.msra.mxu0 0.0
    %83 = vmatprep.subr.mxu0 0.0
    %84 = vmatpush1.msra.mxu0 0.0
    %85 = vmatprep.subr.mxu0 0.0
    %86 = vmatpush1.msra.mxu0 0.0
    %87 = vmatprep.subr.mxu0 0.0
    %88 = vmatpush1.msra.mxu0 0.0
    %89 = vmatprep.subr.mxu0 0.0
    %90 = vmatpush1.msra.mxu0 0.0
    %91 = vmatprep.subr.mxu0 0.0
    %92 = vmatpush1.msra.mxu0 0.0
    %93 = vmatprep.subr.mxu0 0.0
    %94 = vmatpush1.msra.mxu0 0.0
    %95 = vmatprep.subr.mxu0 0.0
    %96 = vmatpush1.msra.mxu0 0.0
    %97 = vmatprep.subr.mxu0 0.0
    %98 = vmatpush1.msra.mxu0 0.0
    %99 = vmatprep.subr.mxu0 0.0
    %100 = vmatpush1.msra.mxu0 0.0
    %101 = vmatprep.subr.mxu0 0.0
    %102 = vmatpush1.msra.mxu0 0.0
    %103 = vmatprep.subr.mxu0 0.0
    %104 = vmatpush1.msra.mxu0 0.0
    %105 = vmatprep.subr.mxu0 0.0
    %106 = vmatpush1.msra.mxu0 0.0
    %107 = vmatprep.subr.mxu0 0.0
    %108 = vmatpush1.msra.mxu0 0.0
    %109 = vmatprep.subr.mxu0 0.0
    %110 = vmatpush1.msra.mxu0 0.0
    %111 = vmatprep.mubr.f32.mxu0 0.0
    %112 = vmatmul.mubr.f32.gmra.mrb[0].mxu0 %v38
    %v113 = vpop.f32.mrb[0].mxu0
    %v114 = vadd.f32 %v29, %v113
    %v115 = vpop.f32.mrb[0].mxu0
    %116 = vmatprep.mubr.f32.mxu0 0.0
    %117 = vmatmul.mubr.f32.gmra.mrb[0].mxu0 %v41
    %v118 = vpop.f32.mrb[0].mxu0
    %v119 = vadd.f32 %v34, %v118
    %v120 = vpop.f32.mrb[0].mxu0
    %121 = vdwg.mxu0
    %v122 = vmax.f32 %v114, 0.0
    %v123 = vmax.f32 %v119, 0.0
    %v124 = vld [vmem:[%s3] sm:$0x3]
    %v125 = vld [vmem:[%s4] sm:$0x3]
    %127 = vset.pattern.permute.xlu0 0
    %128 = vperm.xlu0 %127, %v125
    %v129 = vpop.permute.xlu0 %128
    %vm131 = vcmask 80896
    %v133 = vsel %vm131, %v124, 0
    %vm135 = vcmask 1041408
    %v137 = vsel %vm135, %v123, 0
    %139 = vmatprep.subr.mxu0 0.0
    %140 = vmatpush1.msra.mxu0 %v122
    %141 = vmatprep.subr.mxu0 0.0
    %142 = vmatpush1.msra.mxu0 %v137
    %143 = vmatprep.subr.mxu0 0.0
    %144 = vmatpush1.msra.mxu0 0.0
    %145 = vmatprep.subr.mxu0 0.0
    %146 = vmatpush1.msra.mxu0 0.0
    %147 = vmatprep.subr.mxu0 0.0
    %148 = vmatpush1.msra.mxu0 0.0
    %149 = vmatprep.subr.mxu0 0.0
    %150 = vmatpush1.msra.mxu0 0.0
    %151 = vmatprep.subr.mxu0 0.0
    %152 = vmatpush1.msra.mxu0 0.0
    %153 = vmatprep.subr.mxu0 0.0
    %154 = vmatpush1.msra.mxu0 0.0
    %155 = vmatprep.subr.mxu0 0.0
    %156 = vmatpush1.msra.mxu0 0.0
    %157 = vmatprep.subr.mxu0 0.0
    %158 = vmatpush1.msra.mxu0 0.0
    %159 = vmatprep.subr.mxu0 0.0
    %160 = vmatpush1.msra.mxu0 0.0
    %161 = vmatprep.subr.mxu0 0.0
    %162 = vmatpush1.msra.mxu0 0.0
    %163 = vmatprep.subr.mxu0 0.0
    %164 = vmatpush1.msra.mxu0 0.0
    %165 = vmatprep.subr.mxu0 0.0
    %166 = vmatpush1.msra.mxu0 0.0
    %167 = vmatprep.subr.mxu0 0.0
    %168 = vmatpush1.msra.mxu0 0.0
    %169 = vmatprep.subr.mxu0 0.0
    %170 = vmatpush1.msra.mxu0 0.0
    %171 = vmatprep.subr.mxu0 0.0
    %172 = vmatpush1.msra.mxu0 0.0
    %173 = vmatprep.subr.mxu0 0.0
    %174 = vmatpush1.msra.mxu0 0.0
    %175 = vmatprep.subr.mxu0 0.0
    %176 = vmatpush1.msra.mxu0 0.0
    %177 = vmatprep.subr.mxu0 0.0
    %178 = vmatpush1.msra.mxu0 0.0
    %179 = vmatprep.subr.mxu0 0.0
    %180 = vmatpush1.msra.mxu0 0.0
    %181 = vmatprep.subr.mxu0 0.0
    %182 = vmatpush1.msra.mxu0 0.0
    %183 = vmatprep.subr.mxu0 0.0
    %184 = vmatpush1.msra.mxu0 0.0
    %185 = vmatprep.subr.mxu0 0.0
    %186 = vmatpush1.msra.mxu0 0.0
    %187 = vmatprep.subr.mxu0 0.0
    %188 = vmatpush1.msra.mxu0 0.0
    %189 = vmatprep.subr.mxu0 0.0
    %190 = vmatpush1.msra.mxu0 0.0
    %191 = vmatprep.subr.mxu0 0.0
    %192 = vmatpush1.msra.mxu0 0.0
    %193 = vmatprep.subr.mxu0 0.0
    %194 = vmatpush1.msra.mxu0 0.0
    %195 = vmatprep.subr.mxu0 0.0
    %196 = vmatpush1.msra.mxu0 0.0
    %197 = vmatprep.subr.mxu0 0.0
    %198 = vmatpush1.msra.mxu0 0.0
    %199 = vmatprep.subr.mxu0 0.0
    %200 = vmatpush1.msra.mxu0 0.0
    %201 = vmatprep.subr.mxu0 0.0
    %202 = vmatpush1.msra.mxu0 0.0
    %203 = vmatprep.mubr.f32.mxu0 0.0
    %204 = vmatmul.mubr.f32.gmra.mrb[0].mxu0 %v133
    %v205 = vpop.f32.mrb[0].mxu0
    %v206 = vadd.f32 %v129, %v205
    %v207 = vpop.f32.mrb[0].mxu0
    %208 = vdwg.mxu0
    %v210 = vrot.slane %v206, 1
    %v212 = vsub.f32 %v206, %v210
    %v213 = vand.u32 2147483647, %v212
    %v214 = vsub.f32 0.0, %v213
    %v215 = vmul.f32 %v214, 1.442695
    %v216 = vpow.pop %v215
    %v217 = vadd.f32 %v216, 1.0
    %v218 = vrcp.pop %v217
    %v219 = vmul.f32 %v217, %v218
    %v220 = vsub.f32 2.0, %v219
    %v221 = vmul.f32 %v218, %v220
    %v222 = vmul.f32 %v217, %v221
    %v223 = vsub.f32 2.0, %v222
    %v224 = vmul.f32 %v221, %v223
    %v225 = vmul.f32 %v216, %v224
    %vm226 = vcmp.ge.f32.partialorder %v212, 0.0
    %v227 = vsel %vm226, %v224, %v225
    %v228 = vsel %vm226, %v225, %v224
    %v230 = vrot.slane %v228, 7
    %vm232 = vcmask 1040384
    %v233 = vsel %vm232, %v227, %v230
    %234 = vst [vmem:[#allocation2] sm:$0x3] %v233
    // Predicated region
    $region22: #{tpu_custom_call.1} parent=1 // pred_check
      _
    $region23: #{tpu_custom_call.1} parent=1 // pred_check_branch
      %236 = sbr.rel (0) target = $region25
    $region24: #{tpu_custom_call.1} parent=1 // pred_region
      %s238 = ssub.s32 32, 32
      %239 = vsyncadd [#allocation3], %s238
      %s241 = sshll.u32 [#allocation2], 4
      %s242 = int_to_ptr.vmem [resolvable:$true] %s241
      %244 = dma.vmem_to_hbm [thread:$0]  %s242, 32, %s5, [#allocation3]
    $region25: #{tpu_custom_call.1} parent=1 // pred_fallthru
      _
    // Predicated region
    $region26: #{tpu_custom_call.1} parent=1 // pred_check
      _
    $region27: #{tpu_custom_call.1} parent=1 // pred_check_branch
      %246 = sbr.rel (0) target = $region29
    $region28: #{tpu_custom_call.1} parent=1 // pred_region
      %247 = dma.done [#allocation3], 32
    $region29: #{tpu_custom_call.1} parent=1 // pred_fallthru
      _
    %248 = vsyncpa [#allocation3], 1

</llo_original>
